<compile_context>
chip_gen: v5e
topology: v5e:2x2
jax: 0.10.0
libtpu: 0.0.40
codegen_flags: <defaults>
</compile_context>

<pallas_src>
import jax
import jax.numpy as jnp
from jax.experimental import pallas as pl
from jax.experimental.pallas import tpu as pltpu

_LANES = 128        # vreg lane width: last dim of every block
_TM = 2048          # row tile for the gridded path: (2048, 128) f32 = 1 MiB / block
_SMALL_ROWS = 64    # <= 64 rows (8K elements): single un-gridded call


def _round_up(n, m):
    return ((n + m - 1) // m) * m


def _net_kernel(cd_ref, x_ref, o_ref):
    """y = x*c + d.  cd_ref: f32[2] = (c, d) in SMEM; x/o: lane-dense f32 VMEM blocks."""
    o_ref[...] = x_ref[...] * cd_ref[0] + cd_ref[1]


@jax.jit
def net_forward(x, w1, b1, w2, b2):
    """Forward pass of Net for x of shape (N, 1), float32 (torch nn.Linear conventions).

    w1: linear1.weight (3, 1)   b1: linear1.bias (3,)
    w2: linear2.weight (1, 3)   b2: linear2.bias (1,)
    Returns (N, 1) float32.
    """
    N = x.shape[0]
    assert x.shape == (N, 1)

    # Fold both affine layers into two scalars (exact: no activation in between;
    # only the f32 rounding order differs from the two-matmul reference).
    w1f = jnp.asarray(w1, jnp.float32).reshape(3)
    b1f = jnp.asarray(b1, jnp.float32).reshape(3)
    w2f = jnp.asarray(w2, jnp.float32).reshape(3)
    b2f = jnp.asarray(b2, jnp.float32).reshape(1)
    cd = jnp.stack([jnp.sum(w1f * w2f), jnp.sum(b1f * w2f) + b2f[0]])  # (2,) = (c, d)

    # Lane-dense layout (rows, 128). Copy-free when N is already a lane multiple.
    if N % _LANES == 0:
        rows = N // _LANES
        x2d = x.reshape(rows, _LANES)            # pure view, no HBM copy
        padded = False
    else:
        n_pad = _round_up(N, _LANES)
        rows = n_pad // _LANES
        x2d = jnp.pad(x.reshape(-1), (0, n_pad - N)).reshape(rows, _LANES)
        padded = True

    smem_spec = pl.BlockSpec(memory_space=pltpu.MemorySpace.SMEM)

    if rows <= _SMALL_ROWS:
        # Tiny batch: whole (rows, 128) block resident in VMEM, no grid / pipeline
        # prologue overhead (this covers the spec's torch.randn(10, 1) case).
        out2d = pl.pallas_call(
            _net_kernel,
            out_shape=jax.ShapeDtypeStruct((rows, _LANES), jnp.float32),
            in_specs=[smem_spec,
                      pl.BlockSpec(memory_space=pltpu.MemorySpace.VMEM)],
            out_specs=pl.BlockSpec(memory_space=pltpu.MemorySpace.VMEM),
        )(cd, x2d)
    else:
        # Gridded, double-buffered path. Keep >= 2 grid steps so the "parallel"
        # axis actually shards across both v7x TensorCores; let Pallas mask the
        # partial last block instead of re-padding rows to a tile multiple.
        tm = min(_TM, _round_up(pl.cdiv(rows, 2), 8))
        out2d = pl.pallas_call(
            _net_kernel,
            out_shape=jax.ShapeDtypeStruct((rows, _LANES), jnp.float32),
            grid=(pl.cdiv(rows, tm),),
            in_specs=[smem_spec,
                      pl.BlockSpec((tm, _LANES), lambda i: (i, 0))],
            out_specs=pl.BlockSpec((tm, _LANES), lambda i: (i, 0)),
            compiler_params=pltpu.CompilerParams(
                dimension_semantics=("parallel",),
                # double-buffered in+out at 1 MiB/block = 4 MiB; explicit limit
                # keeps bigger tiles safe even on v5e's 16 MiB default.
                vmem_limit_bytes=32 << 20,
            ),
        )(cd, x2d)

    flat = out2d.reshape(-1)
    if padded:
        flat = flat[:N]
    return flat.reshape(N, 1)


if __name__ == "__main__":
    key = jax.random.PRNGKey(0)
    kx, k1, k2, k3, k4 = jax.random.split(key, 5)

    # Deterministic params with nn.Linear shapes (weight is (out, in)).
    w1 = jax.random.uniform(k1, (3, 1), jnp.float32, -1.0, 1.0)           # linear1.weight
    b1 = jax.random.uniform(k2, (3,), jnp.float32, -1.0, 1.0)             # linear1.bias
    w2 = jax.random.uniform(k3, (1, 3), jnp.float32, -1.0 / 3, 1.0 / 3)   # linear2.weight
    b2 = jax.random.uniform(k4, (1,), jnp.float32, -1.0 / 3, 1.0 / 3)     # linear2.bias

    def ref_forward(x):
        # Plain-JAX reference: linear2(linear1(x)) with torch conventions.
        return (x @ w1.T + b1) @ w2.T + b2

    # 1) N=10: the spec's torch.randn(10, 1) shape -> padded, un-gridded small path.
    # 2) N=128*200: copy-free fast path (no pad/slice), gridded, masked edge block.
    # 3) N=128*129+37: padded, gridded, partial last block via pl.cdiv.
    for n in (10, 128 * 200, 128 * 129 + 37):
        x = jax.random.normal(jax.random.fold_in(kx, n), (n, 1), jnp.float32)
        out = net_forward(x, w1, b1, w2, b2)
        jax.block_until_ready(out)
        ref = ref_forward(x)
        assert out.shape == (n, 1)
        assert jnp.allclose(out, ref, atol=1e-5), f"mismatch vs reference at N={n}"

    print("KERNEL_OK")
</pallas_src>

<mosaic_0001>
module attributes {stable_mosaic.version = 11 : i64} {
  func.func @_net_kernel(%arg0: memref<2xf32, #tpu.memory_space<smem>>, %arg1: memref<1x128xf32, #tpu.memory_space<vmem>>, %arg2: memref<1x128xf32, #tpu.memory_space<vmem>>) attributes {dimension_semantics = [], scalar_prefetch = 0 : i64, scratch_operands = 0 : i64, tpu.core_type = #tpu.core_type<tc>} {
    %c0 = arith.constant 0 : index
    %c0_0 = arith.constant 0 : index
    %0 = vector.load %arg1[%c0, %c0_0] : memref<1x128xf32, #tpu.memory_space<vmem>>, vector<1x128xf32>
    %c0_1 = arith.constant 0 : index
    %1 = memref.load %arg0[%c0_1] : memref<2xf32, #tpu.memory_space<smem>>
    %2 = vector.broadcast %1 : f32 to vector<1x128xf32>
    %3 = arith.mulf %0, %2 : vector<1x128xf32>
    %c1 = arith.constant 1 : index
    %4 = memref.load %arg0[%c1] : memref<2xf32, #tpu.memory_space<smem>>
    %5 = vector.broadcast %4 : f32 to vector<1x128xf32>
    %6 = arith.addf %3, %5 : vector<1x128xf32>
    %c0_2 = arith.constant 0 : index
    %c0_3 = arith.constant 0 : index
    %7 = vector.load %arg2[%c0_2, %c0_3] : memref<1x128xf32, #tpu.memory_space<vmem>>, vector<1x128xf32>
    tpu.vector_store %arg2[%c0_2, %c0_3], %6 {strides = array<i32>} : memref<1x128xf32, #tpu.memory_space<vmem>>, vector<1x128xf32>,
    return
  }
}

</mosaic_0001>

<llo_original>
// kernel: net_forward.1
$region0: #{net_forward.1}
  #allocation0 [shape = 'u32[]', space=smem, size = 0x4, offset = 0x4, fixed_abs, tag = 'smem constant byte address 0x4 - core index']
  #allocation1 [shape = 'u32[72,128]{1,0:T(1,128)}', space=vmem, size = 0x9000, scoped, tag = 'internal scratch']
  %s0 = inlined_call_operand.vmem [shape: f32[2], index: 0, kind: input, shape index: {}]
  %s1 = inlined_call_operand.vmem [shape: f32[1,128], index: 1, kind: input, shape index: {}]
  %s2 = inlined_call_operand.vmem [shape: f32[1,128], index: 2, kind: output, shape index: {}]
  %s3 = sld [smem:[#allocation0]]
  $region22: #{net_forward.1} parent=0
    _
  %s5 = ssub.s32 1, %s3
  %s6 = scalar_select 0, %s5, %s3
  $region1: #{net_forward.1} parent=0
    #allocation2 [shape = 'u8[512]{0}', space=smem, size = 0x200, scoped, tag = 'input window, operand 0, single buffered']
    #allocation3 [shape = 's32[1]{0}', space=sflag, size = 0x4, scoped, tag = 'scoped memory for net_forward.1']
    %7 = vsyncpa [#allocation3], 0
    // Predicated region
    $region2: #{net_forward.1} parent=1 // pred_check
      _
    $region3: #{net_forward.1} parent=1 // pred_check_branch
      %9 = sbr.rel (0) target = $region5
    $region4: #{net_forward.1} parent=1 // pred_region
      %11 = vsyncadd [#allocation3], 0
      %s13 = sshll.u32 %s0, 4
      %s14 = int_to_ptr.vmem [resolvable:$true] %s13
      %16 = dma.vmem_to_smem %s14, 16, [#allocation2], [#allocation3]
    $region5: #{net_forward.1} parent=1 // pred_fallthru
      _
    // Predicated region
    $region6: #{net_forward.1} parent=1 // pred_check
      _
    $region7: #{net_forward.1} parent=1 // pred_check_branch
      %18 = sbr.rel (0) target = $region9
    $region8: #{net_forward.1} parent=1 // pred_region
      _
    $region9: #{net_forward.1} parent=1 // pred_fallthru
      _
    // Predicated region
    $region10: #{net_forward.1} parent=1 // pred_check
      _
    $region11: #{net_forward.1} parent=1 // pred_check_branch
      %20 = sbr.rel (0) target = $region13
    $region12: #{net_forward.1} parent=1 // pred_region
      %22 = dma.done [#allocation3], 16
    $region13: #{net_forward.1} parent=1 // pred_fallthru
      _
    %23 = sfence
    %v24 = vld [vmem:[%s1] sm:$0x1]
    %s25 = sld [smem:[#allocation2]]
    %v26 = vstv %s25
    %v27 = vmul.f32 %v24, %v26
    %s28 = sld [smem:[#allocation2 + $0x1]]
    %v29 = vstv %s28
    %v30 = vadd.f32 %v27, %v29
    %31 = vst [vmem:[%s2] sm:$0x1] %v30
    // Predicated region
    $region14: #{net_forward.1} parent=1 // pred_check
      _
    $region15: #{net_forward.1} parent=1 // pred_check_branch
      %33 = sbr.rel (0) target = $region17
    $region16: #{net_forward.1} parent=1 // pred_region
      _
    $region17: #{net_forward.1} parent=1 // pred_fallthru
      _
    // Predicated region
    $region18: #{net_forward.1} parent=1 // pred_check
      _
    $region19: #{net_forward.1} parent=1 // pred_check_branch
      %35 = sbr.rel (0) target = $region21
    $region20: #{net_forward.1} parent=1 // pred_region
      _
    $region21: #{net_forward.1} parent=1 // pred_fallthru
      _
    %36 = vsyncpa [#allocation3], 1

</llo_original>
